<compile_context>
chip_gen: v7x
topology: tpu7x:2x2x1
jax: 0.10.0
libtpu: 0.0.40
codegen_flags: <defaults>
</compile_context>

<pallas_src>
import functools

import jax
import jax.numpy as jnp
import numpy as np
from jax.experimental import pallas as pl
from jax.experimental.pallas import tpu as pltpu


def _sine_layer_kernel(x_ref, w_ref, b_ref, o_ref, *, precision):
    # x_ref: (tile_rows, K_eff)  activation tile (f32 or bf16)
    # w_ref: (K_eff, N_eff)      w0-scaled weight, pre-transposed (K on sublanes), resident in VMEM
    # b_ref: (1, N_eff)          w0-scaled bias (f32), resident in VMEM
    # o_ref: (tile_rows, N_eff)  output tile
    z = jnp.dot(
        x_ref[...], w_ref[...],
        preferred_element_type=jnp.float32,   # f32 accumulation
        precision=precision,                  # HIGHEST for f32 inputs (exact f32 matmul)
    )
    o_ref[...] = jnp.sin(z + b_ref[...]).astype(o_ref.dtype)


def _vmem_capacity_bytes():
    """Generation-aware VMEM capacity (128 MiB on v5e/v6e, 64 MiB per-TC on v7x)."""
    try:
        return int(pltpu.get_tpu_info().vmem_capacity_bytes)
    except Exception:
        return 64 << 20  # conservative fallback (v7x per-TC)


def sine_layer(x, weight, bias, *, w0=30.0, out_dtype=None, tile_rows=None):
    """SIREN sine layer forward: sin(w0 * (x @ W^T + b)).

    x:      [bsz, nsmpl, dim_in]  (f32 or bf16; the PyTorch f64 input path is computed in f32)
    weight: [dim_out, dim_in]     (PyTorch nn.Linear layout)
    bias:   [dim_out]
    returns [bsz, nsmpl, dim_out]; dtype defaults to f32 for f32 inputs (matching the
            module's float output) and bf16 for bf16 inputs (halves output HBM traffic).
    """
    bsz, nsmpl, dim_in = x.shape
    dim_out = weight.shape[0]
    rows = bsz * nsmpl

    # Keep bf16 activations in bf16 (halves the dominant HBM stream); otherwise compute in f32.
    cdtype = jnp.bfloat16 if x.dtype == jnp.bfloat16 else jnp.float32
    if out_dtype is None:
        out_dtype = jnp.bfloat16 if cdtype == jnp.bfloat16 else jnp.float32
    precision = jax.lax.Precision.HIGHEST if cdtype == jnp.float32 else None

    x2d = x.reshape(rows, dim_in)
    if x2d.dtype != cdtype:
        x2d = x2d.astype(cdtype)

    # Fold w0 into the tiny, grid-invariant weight/bias:
    #   sin(w0 * (x @ W^T + b)) == sin(x @ (w0*W)^T + w0*b)
    w_f = jnp.float32(w0) * weight.astype(jnp.float32)
    b_f = jnp.float32(w0) * bias.astype(jnp.float32)

    # Lane-dense packing: for small dim_out, pad the output dim to the next power of two
    # (a divisor of 128) and pack k = 128 // n_pad logical rows per physical row with a
    # block-diagonal weight so output stores are full 128-lane vst.
    if dim_out <= 64:
        n_pad = max(1, int(pl.next_power_of_2(dim_out)))
        k = 128 // n_pad
    else:
        n_pad = dim_out
        k = 1

    x_b = jnp.dtype(cdtype).itemsize
    o_b = jnp.dtype(out_dtype).itemsize

    # Cap k so the resident packed (k*dim_in, k*n_pad) weight stays small in VMEM.
    # TODO(synk): tile the contraction (K) axis with an f32 accumulator instead of shrinking
    #             k if a huge dim_in ever makes the packed weight the VMEM bottleneck.
    while k > 1 and (k * k * dim_in * n_pad * x_b) > (12 << 20):
        k //= 2

    if n_pad != dim_out:
        w_f = jnp.pad(w_f, ((0, n_pad - dim_out), (0, 0)))
        b_f = jnp.pad(b_f, ((0, n_pad - dim_out),))

    pad = (-rows) % k
    if pad:
        # TODO(synk): split the <k leftover rows into a tiny tail path instead of a
        #             whole-array pad/slice copy when rows % k != 0.
        x2d = jnp.pad(x2d, ((0, pad), (0, 0)))
    prows = (rows + pad) // k

    if k > 1:
        x2d = x2d.reshape(prows, k * dim_in)
        # Block-diagonal, pre-transposed weight: (k*dim_in, k*n_pad) = [K_eff, N_eff].
        w_t = jnp.kron(jnp.eye(k, dtype=jnp.float32), w_f.T)
        b_eff = jnp.tile(b_f, k)
    else:
        w_t = w_f.T                      # [dim_in, n_pad] = [K_eff, N_eff]
        b_eff = b_f

    w_t = w_t.astype(cdtype)
    k_eff = x2d.shape[1]
    n_eff = w_t.shape[1]
    b2d = b_eff.reshape(1, n_eff)

    # Row-tile selection: largest tile whose double-buffered x/out tiles plus the resident
    # (single-buffered) weight/bias fit ~75% of this generation's VMEM.
    resident = k_eff * n_eff * x_b + 8 * max(128, n_eff) * 4       # weight + padded bias
    per_row = 2 * (k_eff * x_b + n_eff * o_b)                       # dbl-buffered x + out
    budget = (3 * _vmem_capacity_bytes()) // 4 - resident
    align = 16 if cdtype == jnp.bfloat16 else 8
    if tile_rows is None:
        tile_rows = max(align, min(16384, budget // per_row))
    tile_rows = int(tile_rows)
    if tile_rows >= prows:
        tile_rows = prows                 # single (full-extent) block is always legal
    else:
        tile_rows = max(align, (tile_rows // align) * align)

    grid = (pl.cdiv(prows, tile_rows),)   # ragged tail handled by a partial last block
    vmem_limit = int(resident + tile_rows * per_row + (8 << 20))    # footprint + headroom

    out = pl.pallas_call(
        functools.partial(_sine_layer_kernel, precision=precision),
        out_shape=jax.ShapeDtypeStruct((prows, n_eff), out_dtype),
        grid_spec=pltpu.PrefetchScalarGridSpec(
            num_scalar_prefetch=0,
            grid=grid,
            in_specs=[
                pl.BlockSpec((tile_rows, k_eff), lambda i: (i, 0)),
                # Grid-invariant operands: whole-array, single-buffered, resident in VMEM
                # (fetched once; no wasted second pipeline buffer).
                pl.BlockSpec(memory_space=pltpu.MemorySpace.VMEM),
                pl.BlockSpec(memory_space=pltpu.MemorySpace.VMEM),
            ],
            out_specs=pl.BlockSpec((tile_rows, n_eff), lambda i: (i, 0)),
        ),
        compiler_params=pltpu.CompilerParams(
            dimension_semantics=("parallel",),   # row tiles can shard across v7x's 2 TCs
            vmem_limit_bytes=vmem_limit,
        ),
    )(x2d, w_t, b2d)

    out = out.reshape(prows * k, n_pad)
    if pad or n_pad != dim_out:
        out = out[:rows, :dim_out]
    return out.reshape(bsz, nsmpl, dim_out)


def init_sine_layer_params(dim_in, dim_out, *, is_first=False, w0=30.0, seed=0):
    """Deterministic init mirroring Sine_Layer.init_weights / nn.Linear bias init."""
    key = jax.random.PRNGKey(seed)
    k_w, k_b = jax.random.split(key)
    std = (1.0 / dim_in) if is_first else (np.sqrt(6.0 / dim_in) / w0)
    weight = jax.random.uniform(
        k_w, (dim_out, dim_in), dtype=jnp.float32, minval=-std, maxval=std
    )
    bound = 1.0 / np.sqrt(dim_in)  # PyTorch nn.Linear default bias init
    bias = jax.random.uniform(
        k_b, (dim_out,), dtype=jnp.float32, minval=-bound, maxval=bound
    )
    return weight, bias


if __name__ == "__main__":
    w0 = 30.0
    bsz, nsmpl, dim_in, dim_out = 2, 64, 32, 32

    key = jax.random.PRNGKey(0)
    x = jax.random.normal(key, (bsz, nsmpl, dim_in), dtype=jnp.float32)

    # Hidden-layer shape (dim_out = 32, kron-packed k = 4).
    weight, bias = init_sine_layer_params(dim_in, dim_out, is_first=False, w0=w0, seed=0)
    y = sine_layer(x, weight, bias, w0=w0)
    y = jax.block_until_ready(y)

    ref = jnp.sin(
        w0 * (jnp.matmul(x, weight.T, precision=jax.lax.Precision.HIGHEST) + bias)
    )
    np.testing.assert_allclose(np.asarray(y), np.asarray(ref), atol=2e-5, rtol=2e-5)
    assert y.shape == (bsz, nsmpl, dim_out)
    assert y.dtype == jnp.float32

    # Output-head shape (dim_out = 3 does not divide 128: padded to 4, k = 32).
    weight3, bias3 = init_sine_layer_params(dim_in, 3, is_first=True, w0=w0, seed=1)
    y3 = sine_layer(x, weight3, bias3, w0=w0)
    y3 = jax.block_until_ready(y3)

    ref3 = jnp.sin(
        w0 * (jnp.matmul(x, weight3.T, precision=jax.lax.Precision.HIGHEST) + bias3)
    )
    np.testing.assert_allclose(np.asarray(y3), np.asarray(ref3), atol=2e-5, rtol=2e-5)
    assert y3.shape == (bsz, nsmpl, 3)

    print("KERNEL_OK")
</pallas_src>

<mosaic_0001>
module attributes {stable_mosaic.version = 11 : i64} {
  func.func @_sine_layer_kernel(%arg0: i32, %arg1: memref<32x128xf32, #tpu.memory_space<vmem>>, %arg2: memref<128x128xf32, #tpu.memory_space<vmem>>, %arg3: memref<1x128xf32, #tpu.memory_space<vmem>>, %arg4: memref<32x128xf32, #tpu.memory_space<vmem>>) attributes {dimension_semantics = [#tpu.dimension_semantics<parallel>], iteration_bounds = array<i64: 1>, scalar_prefetch = 0 : i64, scratch_operands = 0 : i64, tpu.core_type = #tpu.core_type<tc>, window_params = [{transform_indices = @transform_0, window_bounds = array<i64: 32, 128>}, {pipeline_mode = #tpu.pipeline_mode<synchronous>, transform_indices = @transform_1, window_bounds = array<i64: 128, 128>}, {pipeline_mode = #tpu.pipeline_mode<synchronous>, transform_indices = @transform_2, window_bounds = array<i64: 1, 128>}, {transform_indices = @transform_3, window_bounds = array<i64: 32, 128>}]} {
    %c0 = arith.constant 0 : index
    %c0_0 = arith.constant 0 : index
    %0 = vector.load %arg1[%c0, %c0_0] : memref<32x128xf32, #tpu.memory_space<vmem>>, vector<32x128xf32>
    %c0_1 = arith.constant 0 : index
    %c0_2 = arith.constant 0 : index
    %1 = vector.load %arg2[%c0_1, %c0_2] : memref<128x128xf32, #tpu.memory_space<vmem>>, vector<128x128xf32>
    %cst = arith.constant dense<0.000000e+00> : vector<32x128xf32>
    %2 = tpu.matmul %0, %1, %cst {dimension_numbers = #tpu.dot_dimension_numbers<[1], [0], [0], [1], [0, 0, 1, 1], [], []>, precision = #tpu.contract_precision<fp32>} : vector<32x128xf32>, vector<128x128xf32>, vector<32x128xf32> -> vector<32x128xf32>
    %c0_3 = arith.constant 0 : index
    %c0_4 = arith.constant 0 : index
    %3 = vector.load %arg3[%c0_3, %c0_4] : memref<1x128xf32, #tpu.memory_space<vmem>>, vector<1x128xf32>
    %4 = vector.broadcast %3 : vector<1x128xf32> to vector<32x128xf32>
    %5 = arith.addf %2, %4 : vector<32x128xf32>
    %6 = math.sin %5 : vector<32x128xf32>
    %c0_5 = arith.constant 0 : index
    %c0_6 = arith.constant 0 : index
    %7 = vector.load %arg4[%c0_5, %c0_6] : memref<32x128xf32, #tpu.memory_space<vmem>>, vector<32x128xf32>
    tpu.vector_store %arg4[%c0_5, %c0_6], %6 {strides = array<i32>} : memref<32x128xf32, #tpu.memory_space<vmem>>, vector<32x128xf32>,
    return
  }
  func.func @transform_0(%arg0: i32) -> (i32, i32) {
    %c0_i32 = arith.constant 0 : i32
    %c0_i32_0 = arith.constant 0 : i32
    return %arg0, %c0_i32 : i32, i32
  }
  func.func @transform_1(%arg0: i32) -> (i32, i32) {
    %c0_i32 = arith.constant 0 : i32
    %c0_i32_0 = arith.constant 0 : i32
    %c0_i32_1 = arith.constant 0 : i32
    return %c0_i32, %c0_i32_0 : i32, i32
  }
  func.func @transform_2(%arg0: i32) -> (i32, i32) {
    %c0_i32 = arith.constant 0 : i32
    %c0_i32_0 = arith.constant 0 : i32
    %c0_i32_1 = arith.constant 0 : i32
    return %c0_i32, %c0_i32_0 : i32, i32
  }
  func.func @transform_3(%arg0: i32) -> (i32, i32) {
    %c0_i32 = arith.constant 0 : i32
    %c0_i32_0 = arith.constant 0 : i32
    return %arg0, %c0_i32 : i32, i32
  }
}

</mosaic_0001>

<llo_original>
// kernel: tpu_custom_call.1
$region0: #{tpu_custom_call.1}
  #allocation0 [shape = 'u32[]', space=smem, size = 0x4, offset = 0x4, fixed_abs, tag = 'smem constant byte address 0x4 - core index']
  #allocation1 [shape = 'u32[144,128]{1,0:T(1,128)}', space=vmem, size = 0x12000, scoped, tag = 'internal scratch']
  %s0 = inlined_call_operand.hbm [shape: f32[32,128], index: 0, kind: input, shape index: {}]
  %s1 = inlined_call_operand.hbm [shape: f32[128,128], index: 1, kind: input, shape index: {}]
  %s2 = inlined_call_operand.vmem [shape: f32[1,128], index: 2, kind: input, shape index: {}]
  %s3 = inlined_call_operand.hbm [shape: f32[32,128], index: 3, kind: output, shape index: {}]
  %s4 = sld [smem:[#allocation0]]
  $region30: #{tpu_custom_call.1} parent=0
    _
  %s6 = ssub.s32 1, %s4
  %s7 = scalar_select 0, %s6, %s4
  $region1: #{tpu_custom_call.1} parent=0
    #allocation2 [shape = 'u8[16384]{0}', space=vmem, size = 0x4000, scoped, tag = 'input window, operand 0, single buffered']
    #allocation3 [shape = 's32[1]{0}', space=sflag, size = 0x4, scoped, tag = 'scoped memory for tpu_custom_call.1']
    #allocation4 [shape = 's32[1]{0}', space=sflag, size = 0x4, scoped, tag = 'scoped memory for tpu_custom_call.1']
    #allocation5 [shape = 'u8[65536]{0}', space=vmem, size = 0x10000, scoped, tag = 'input window, operand 1, single buffered']
    #allocation6 [shape = 's32[1]{0}', space=sflag, size = 0x4, scoped, tag = 'scoped memory for tpu_custom_call.1']
    #allocation7 [shape = 'u8[16384]{0}', space=vmem, size = 0x4000, scoped, tag = 'output window, operand 0, single buffered']
    %8 = vsyncpa [#allocation3], 0
    %9 = vsyncpa [#allocation6], 0
    %10 = vsyncpa [#allocation4], 0
    // Predicated region
    $region2: #{tpu_custom_call.1} parent=1 // pred_check
      _
    $region3: #{tpu_custom_call.1} parent=1 // pred_check_branch
      %12 = sbr.rel (0) target = $region5
    $region4: #{tpu_custom_call.1} parent=1 // pred_region
      %s14 = ssub.s32 512, 512
      %15 = vsyncadd [#allocation3], %s14
      %s16 = sshll.u32 [#allocation2], 4
      %s17 = int_to_ptr.vmem [resolvable:$true] %s16
      %22 = dma.hbm_to_vmem [thread:$0]  %s0, 512, %s17, [#allocation3], 128, 128, 8
    $region5: #{tpu_custom_call.1} parent=1 // pred_fallthru
      _
    // Predicated region
    $region6: #{tpu_custom_call.1} parent=1 // pred_check
      _
    $region7: #{tpu_custom_call.1} parent=1 // pred_check_branch
      %24 = sbr.rel (0) target = $region9
    $region8: #{tpu_custom_call.1} parent=1 // pred_region
      %s26 = ssub.s32 2048, 2048
      %27 = vsyncadd [#allocation6], %s26
      %s28 = sshll.u32 [#allocation5], 4
      %s29 = int_to_ptr.vmem [resolvable:$true] %s28
      %34 = dma.hbm_to_vmem [thread:$0]  %s1, 2048, %s29, [#allocation6], 128, 128, 8
    $region9: #{tpu_custom_call.1} parent=1 // pred_fallthru
      _
    // Predicated region
    $region10: #{tpu_custom_call.1} parent=1 // pred_check
      _
    $region11: #{tpu_custom_call.1} parent=1 // pred_check_branch
      %36 = sbr.rel (0) target = $region13
    $region12: #{tpu_custom_call.1} parent=1 // pred_region
      _
    $region13: #{tpu_custom_call.1} parent=1 // pred_fallthru
      _
    // Predicated region
    $region14: #{tpu_custom_call.1} parent=1 // pred_check
      _
    $region15: #{tpu_custom_call.1} parent=1 // pred_check_branch
      %38 = sbr.rel (0) target = $region17
    $region16: #{tpu_custom_call.1} parent=1 // pred_region
      %39 = dma.done [#allocation3], 512
    $region17: #{tpu_custom_call.1} parent=1 // pred_fallthru
      _
    // Predicated region
    $region18: #{tpu_custom_call.1} parent=1 // pred_check
      _
    $region19: #{tpu_custom_call.1} parent=1 // pred_check_branch
      %41 = sbr.rel (0) target = $region21
    $region20: #{tpu_custom_call.1} parent=1 // pred_region
      %42 = dma.done [#allocation6], 2048
    $region21: #{tpu_custom_call.1} parent=1 // pred_fallthru
      _
    %v43 = vld [vmem:[#allocation2] sm:$0xff]
    %v44 = vld [vmem:[#allocation2 + $0x8] sm:$0xff]
    %v45 = vld [vmem:[#allocation2 + $0x10] sm:$0xff]
    %v46 = vld [vmem:[#allocation2 + $0x18] sm:$0xff]
    %v47 = vld [vmem:[#allocation5] sm:$0xff]
    %v48 = vld [vmem:[#allocation5 + $0x8] sm:$0xff]
    %v49 = vld [vmem:[#allocation5 + $0x10] sm:$0xff]
    %v50 = vld [vmem:[#allocation5 + $0x18] sm:$0xff]
    %v51 = vld [vmem:[#allocation5 + $0x20] sm:$0xff]
    %v52 = vld [vmem:[#allocation5 + $0x28] sm:$0xff]
    %v53 = vld [vmem:[#allocation5 + $0x30] sm:$0xff]
    %v54 = vld [vmem:[#allocation5 + $0x38] sm:$0xff]
    %v55 = vld [vmem:[#allocation5 + $0x40] sm:$0xff]
    %v56 = vld [vmem:[#allocation5 + $0x48] sm:$0xff]
    %v57 = vld [vmem:[#allocation5 + $0x50] sm:$0xff]
    %v58 = vld [vmem:[#allocation5 + $0x58] sm:$0xff]
    %v59 = vld [vmem:[#allocation5 + $0x60] sm:$0xff]
    %v60 = vld [vmem:[#allocation5 + $0x68] sm:$0xff]
    %v61 = vld [vmem:[#allocation5 + $0x70] sm:$0xff]
    %v62 = vld [vmem:[#allocation5 + $0x78] sm:$0xff]
    %v63 = vld [vmem:[%s2] sm:$0x1]
    %v65 = vlaneseq
    %v66 = vshrl.u32 %v65, 7
    %v67 = vsub.s32 0, %v66
    %v68 = vrot.slane %v63, %v67
    %70 = vmatprep.subr.mxu0 0.0
    %v71 = vand.u32 %v47, 4294901760
    %72 = vmatpush1.msra.mxu0 %v71
    %73 = vmatprep.subr.mxu0 0.0
    %v74 = vand.u32 %v48, 4294901760
    %75 = vmatpush1.msra.mxu0 %v74
    %76 = vmatprep.subr.mxu0 0.0
    %v77 = vand.u32 %v49, 4294901760
    %78 = vmatpush1.msra.mxu0 %v77
    %79 = vmatprep.subr.mxu0 0.0
    %v80 = vand.u32 %v50, 4294901760
    %81 = vmatpush1.msra.mxu0 %v80
    %82 = vmatprep.subr.mxu0 0.0
    %v83 = vand.u32 %v51, 4294901760
    %84 = vmatpush1.msra.mxu0 %v83
    %85 = vmatprep.subr.mxu0 0.0
    %v86 = vand.u32 %v52, 4294901760
    %87 = vmatpush1.msra.mxu0 %v86
    %88 = vmatprep.subr.mxu0 0.0
    %v89 = vand.u32 %v53, 4294901760
    %90 = vmatpush1.msra.mxu0 %v89
    %91 = vmatprep.subr.mxu0 0.0
    %v92 = vand.u32 %v54, 4294901760
    %93 = vmatpush1.msra.mxu0 %v92
    %94 = vmatprep.subr.mxu0 0.0
    %v95 = vand.u32 %v55, 4294901760
    %96 = vmatpush1.msra.mxu0 %v95
    %97 = vmatprep.subr.mxu0 0.0
    %v98 = vand.u32 %v56, 4294901760
    %99 = vmatpush1.msra.mxu0 %v98
    %100 = vmatprep.subr.mxu0 0.0
    %v101 = vand.u32 %v57, 4294901760
    %102 = vmatpush1.msra.mxu0 %v101
    %103 = vmatprep.subr.mxu0 0.0
    %v104 = vand.u32 %v58, 4294901760
    %105 = vmatpush1.msra.mxu0 %v104
    %106 = vmatprep.subr.mxu0 0.0
    %v107 = vand.u32 %v59, 4294901760
    %108 = vmatpush1.msra.mxu0 %v107
    %109 = vmatprep.subr.mxu0 0.0
    %v110 = vand.u32 %v60, 4294901760
    %111 = vmatpush1.msra.mxu0 %v110
    %112 = vmatprep.subr.mxu0 0.0
    %v113 = vand.u32 %v61, 4294901760
    %114 = vmatpush1.msra.mxu0 %v113
    %115 = vmatprep.subr.mxu0 0.0
    %v116 = vand.u32 %v62, 4294901760
    %117 = vmatpush1.msra.mxu0 %v116
    %118 = vmatprep.subr.mxu0 0.0
    %119 = vmatpush1.msra.mxu0 0.0
    %120 = vmatprep.subr.mxu0 0.0
    %121 = vmatpush1.msra.mxu0 0.0
    %122 = vmatprep.subr.mxu0 0.0
    %123 = vmatpush1.msra.mxu0 0.0
    %124 = vmatprep.subr.mxu0 0.0
    %125 = vmatpush1.msra.mxu0 0.0
    %126 = vmatprep.subr.mxu0 0.0
    %127 = vmatpush1.msra.mxu0 0.0
    %128 = vmatprep.subr.mxu0 0.0
    %129 = vmatpush1.msra.mxu0 0.0
    %130 = vmatprep.subr.mxu0 0.0
    %131 = vmatpush1.msra.mxu0 0.0
    %132 = vmatprep.subr.mxu0 0.0
    %133 = vmatpush1.msra.mxu0 0.0
    %134 = vmatprep.subr.mxu0 0.0
    %135 = vmatpush1.msra.mxu0 0.0
    %136 = vmatprep.subr.mxu0 0.0
    %137 = vmatpush1.msra.mxu0 0.0
    %138 = vmatprep.subr.mxu0 0.0
    %139 = vmatpush1.msra.mxu0 0.0
    %140 = vmatprep.subr.mxu0 0.0
    %141 = vmatpush1.msra.mxu0 0.0
    %142 = vmatprep.subr.mxu0 0.0
    %143 = vmatpush1.msra.mxu0 0.0
    %144 = vmatprep.subr.mxu0 0.0
    %145 = vmatpush1.msra.mxu0 0.0
    %146 = vmatprep.subr.mxu0 0.0
    %147 = vmatpush1.msra.mxu0 0.0
    %148 = vmatprep.subr.mxu0 0.0
    %149 = vmatpush1.msra.mxu0 0.0
    %150 = vmatprep.mubr.f32.mxu0 0.0
    %v151 = vand.u32 %v43, 4294901760
    %v152 = vsub.f32 %v43, %v151
    %v153 = vand.u32 %v152, 4294901760
    %v154 = vsub.f32 %v152, %v153
    %v155 = vand.u32 %v154, 4294901760
    %156 = vmatmul.mubr.f32.gmra.mrb[0].mxu0 %v155
    %v157 = vpop.f32.mrb[0].mxu0
    %v158 = vadd.f32 %v68, %v157
    %v159 = vpop.f32.mrb[0].mxu0
    %160 = vmatprep.mubr.f32.mxu0 0.0
    %v161 = vand.u32 %v44, 4294901760
    %v162 = vsub.f32 %v44, %v161
    %v163 = vand.u32 %v162, 4294901760
    %v164 = vsub.f32 %v162, %v163
    %v165 = vand.u32 %v164, 4294901760
    %166 = vmatmul.mubr.f32.gmra.mrb[0].mxu0 %v165
    %v167 = vpop.f32.mrb[0].mxu0
    %v168 = vadd.f32 %v68, %v167
    %v169 = vpop.f32.mrb[0].mxu0
    %170 = vmatprep.mubr.f32.mxu0 0.0
    %v171 = vand.u32 %v45, 4294901760
    %v172 = vsub.f32 %v45, %v171
    %v173 = vand.u32 %v172, 4294901760
    %v174 = vsub.f32 %v172, %v173
    %v175 = vand.u32 %v174, 4294901760
    %176 = vmatmul.mubr.f32.gmra.mrb[0].mxu0 %v175
    %v177 = vpop.f32.mrb[0].mxu0
    %v178 = vadd.f32 %v68, %v177
    %v179 = vpop.f32.mrb[0].mxu0
    %180 = vmatprep.mubr.f32.mxu0 0.0
    %v181 = vand.u32 %v46, 4294901760
    %v182 = vsub.f32 %v46, %v181
    %v183 = vand.u32 %v182, 4294901760
    %v184 = vsub.f32 %v182, %v183
    %v185 = vand.u32 %v184, 4294901760
    %186 = vmatmul.mubr.f32.gmra.mrb[0].mxu0 %v185
    %v187 = vpop.f32.mrb[0].mxu0
    %v188 = vadd.f32 %v68, %v187
    %v189 = vpop.f32.mrb[0].mxu0
    %190 = vdwg.mxu0
    %191 = vmatprep.subr.mxu0 0.0
    %v192 = vand.u32 %v47, 4294901760
    %v193 = vsub.f32 %v47, %v192
    %v194 = vand.u32 %v193, 4294901760
    %v195 = vsub.f32 %v193, %v194
    %v196 = vand.u32 %v195, 4294901760
    %197 = vmatpush1.msra.mxu0 %v196
    %198 = vmatprep.subr.mxu0 0.0
    %v199 = vand.u32 %v48, 4294901760
    %v200 = vsub.f32 %v48, %v199
    %v201 = vand.u32 %v200, 4294901760
    %v202 = vsub.f32 %v200, %v201
    %v203 = vand.u32 %v202, 4294901760
    %204 = vmatpush1.msra.mxu0 %v203
    %205 = vmatprep.subr.mxu0 0.0
    %v206 = vand.u32 %v49, 4294901760
    %v207 = vsub.f32 %v49, %v206
    %v208 = vand.u32 %v207, 4294901760
    %v209 = vsub.f32 %v207, %v208
    %v210 = vand.u32 %v209, 4294901760
    %211 = vmatpush1.msra.mxu0 %v210
    %212 = vmatprep.subr.mxu0 0.0
    %v213 = vand.u32 %v50, 4294901760
    %v214 = vsub.f32 %v50, %v213
    %v215 = vand.u32 %v214, 4294901760
    %v216 = vsub.f32 %v214, %v215
    %v217 = vand.u32 %v216, 4294901760
    %218 = vmatpush1.msra.mxu0 %v217
    %219 = vmatprep.subr.mxu0 0.0
    %v220 = vand.u32 %v51, 4294901760
    %v221 = vsub.f32 %v51, %v220
    %v222 = vand.u32 %v221, 4294901760
    %v223 = vsub.f32 %v221, %v222
    %v224 = vand.u32 %v223, 4294901760
    %225 = vmatpush1.msra.mxu0 %v224
    %226 = vmatprep.subr.mxu0 0.0
    %v227 = vand.u32 %v52, 4294901760
    %v228 = vsub.f32 %v52, %v227
    %v229 = vand.u32 %v228, 4294901760
    %v230 = vsub.f32 %v228, %v229
    %v231 = vand.u32 %v230, 4294901760
    %232 = vmatpush1.msra.mxu0 %v231
    %233 = vmatprep.subr.mxu0 0.0
    %v234 = vand.u32 %v53, 4294901760
    %v235 = vsub.f32 %v53, %v234
    %v236 = vand.u32 %v235, 4294901760
    %v237 = vsub.f32 %v235, %v236
    %v238 = vand.u32 %v237, 4294901760
    %239 = vmatpush1.msra.mxu0 %v238
    %240 = vmatprep.subr.mxu0 0.0
    %v241 = vand.u32 %v54, 4294901760
    %v242 = vsub.f32 %v54, %v241
    %v243 = vand.u32 %v242, 4294901760
    %v244 = vsub.f32 %v242, %v243
    %v245 = vand.u32 %v244, 4294901760
    %246 = vmatpush1.msra.mxu0 %v245
    %247 = vmatprep.subr.mxu0 0.0
    %v248 = vand.u32 %v55, 4294901760
    %v249 = vsub.f32 %v55, %v248
    %v250 = vand.u32 %v249, 4294901760
    %v251 = vsub.f32 %v249, %v250
    %v252 = vand.u32 %v251, 4294901760
    %253 = vmatpush1.msra.mxu0 %v252
    %254 = vmatprep.subr.mxu0 0.0
    %v255 = vand.u32 %v56, 4294901760
    %v256 = vsub.f32 %v56, %v255
    %v257 = vand.u32 %v256, 4294901760
    %v258 = vsub.f32 %v256, %v257
    %v259 = vand.u32 %v258, 4294901760
    %260 = vmatpush1.msra.mxu0 %v259
    %261 = vmatprep.subr.mxu0 0.0
    %v262 = vand.u32 %v57, 4294901760
    %v263 = vsub.f32 %v57, %v262
    %v264 = vand.u32 %v263, 4294901760
    %v265 = vsub.f32 %v263, %v264
    %v266 = vand.u32 %v265, 4294901760
    %267 = vmatpush1.msra.mxu0 %v266
    %268 = vmatprep.subr.mxu0 0.0
    %v269 = vand.u32 %v58, 4294901760
    %v270 = vsub.f32 %v58, %v269
    %v271 = vand.u32 %v270, 4294901760
    %v272 = vsub.f32 %v270, %v271
    %v273 = vand.u32 %v272, 4294901760
    %274 = vmatpush1.msra.mxu0 %v273
    %275 = vmatprep.subr.mxu0 0.0
    %v276 = vand.u32 %v59, 4294901760
    %v277 = vsub.f32 %v59, %v276
    %v278 = vand.u32 %v277, 4294901760
    %v279 = vsub.f32 %v277, %v278
    %v280 = vand.u32 %v279, 4294901760
    %281 = vmatpush1.msra.mxu0 %v280
    %282 = vmatprep.subr.mxu0 0.0
    %v283 = vand.u32 %v60, 4294901760
    %v284 = vsub.f32 %v60, %v283
    %v285 = vand.u32 %v284, 4294901760
    %v286 = vsub.f32 %v284, %v285
    %v287 = vand.u32 %v286, 4294901760
    %288 = vmatpush1.msra.mxu0 %v287
    %289 = vmatprep.subr.mxu0 0.0
    %v290 = vand.u32 %v61, 4294901760
    %v291 = vsub.f32 %v61, %v290
    %v292 = vand.u32 %v291, 4294901760
    %v293 = vsub.f32 %v291, %v292
    %v294 = vand.u32 %v293, 4294901760
    %295 = vmatpush1.msra.mxu0 %v294
    %296 = vmatprep.subr.mxu0 0.0
    %v297 = vand.u32 %v62, 4294901760
    %v298 = vsub.f32 %v62, %v297
    %v299 = vand.u32 %v298, 4294901760
    %v300 = vsub.f32 %v298, %v299
    %v301 = vand.u32 %v300, 4294901760
    %302 = vmatpush1.msra.mxu0 %v301
    %303 = vmatprep.subr.mxu0 0.0
    %304 = vmatpush1.msra.mxu0 0.0
    %305 = vmatprep.subr.mxu0 0.0
    %306 = vmatpush1.msra.mxu0 0.0
    %307 = vmatprep.subr.mxu0 0.0
    %308 = vmatpush1.msra.mxu0 0.0
    %309 = vmatprep.subr.mxu0 0.0
    %310 = vmatpush1.msra.mxu0 0.0
    %311 = vmatprep.subr.mxu0 0.0
    %312 = vmatpush1.msra.mxu0 0.0
    %313 = vmatprep.subr.mxu0 0.0
    %314 = vmatpush1.msra.mxu0 0.0
    %315 = vmatprep.subr.mxu0 0.0
    %316 = vmatpush1.msra.mxu0 0.0
    %317 = vmatprep.subr.mxu0 0.0
    %318 = vmatpush1.msra.mxu0 0.0
    %319 = vmatprep.subr.mxu0 0.0
    %320 = vmatpush1.msra.mxu0 0.0
    %321 = vmatprep.subr.mxu0 0.0
    %322 = vmatpush1.msra.mxu0 0.0
    %323 = vmatprep.subr.mxu0 0.0
    %324 = vmatpush1.msra.mxu0 0.0
    %325 = vmatprep.subr.mxu0 0.0
    %326 = vmatpush1.msra.mxu0 0.0
    %327 = vmatprep.subr.mxu0 0.0
    %328 = vmatpush1.msra.mxu0 0.0
    %329 = vmatprep.subr.mxu0 0.0
    %330 = vmatpush1.msra.mxu0 0.0
    %331 = vmatprep.subr.mxu0 0.0
    %332 = vmatpush1.msra.mxu0 0.0
    %333 = vmatprep.subr.mxu0 0.0
    %334 = vmatpush1.msra.mxu0 0.0
    %335 = vmatprep.mubr.f32.mxu0 0.0
    %v336 = vand.u32 %v43, 4294901760
    %337 = vmatmul.mubr.f32.gmra.mrb[0].mxu0 %v336
    %v338 = vpop.f32.mrb[0].mxu0
    %v339 = vadd.f32 %v158, %v338
    %v340 = vpop.f32.mrb[0].mxu0
    %341 = vmatprep.mubr.f32.mxu0 0.0
    %v342 = vand.u32 %v44, 4294901760
    %343 = vmatmul.mubr.f32.gmra.mrb[0].mxu0 %v342
    %v344 = vpop.f32.mrb[0].mxu0
    %v345 = vadd.f32 %v168, %v344
    %v346 = vpop.f32.mrb[0].mxu0
    %347 = vmatprep.mubr.f32.mxu0 0.0
    %v348 = vand.u32 %v45, 4294901760
    %349 = vmatmul.mubr.f32.gmra.mrb[0].mxu0 %v348
    %v350 = vpop.f32.mrb[0].mxu0
    %v351 = vadd.f32 %v178, %v350
    %v352 = vpop.f32.mrb[0].mxu0
    %353 = vmatprep.mubr.f32.mxu0 0.0
    %v354 = vand.u32 %v46, 4294901760
    %355 = vmatmul.mubr.f32.gmra.mrb[0].mxu0 %v354
    %v356 = vpop.f32.mrb[0].mxu0
    %v357 = vadd.f32 %v188, %v356
    %v358 = vpop.f32.mrb[0].mxu0
    %359 = vdwg.mxu0
    %360 = vmatprep.subr.mxu0 0.0
    %v361 = vand.u32 %v47, 4294901760
    %v362 = vsub.f32 %v47, %v361
    %363 = vmatpush1.msra.mxu0 %v362
    %364 = vmatprep.subr.mxu0 0.0
    %v365 = vand.u32 %v48, 4294901760
    %v366 = vsub.f32 %v48, %v365
    %367 = vmatpush1.msra.mxu0 %v366
    %368 = vmatprep.subr.mxu0 0.0
    %v369 = vand.u32 %v49, 4294901760
    %v370 = vsub.f32 %v49, %v369
    %371 = vmatpush1.msra.mxu0 %v370
    %372 = vmatprep.subr.mxu0 0.0
    %v373 = vand.u32 %v50, 4294901760
    %v374 = vsub.f32 %v50, %v373
    %375 = vmatpush1.msra.mxu0 %v374
    %376 = vmatprep.subr.mxu0 0.0
    %v377 = vand.u32 %v51, 4294901760
    %v378 = vsub.f32 %v51, %v377
    %379 = vmatpush1.msra.mxu0 %v378
    %380 = vmatprep.subr.mxu0 0.0
    %v381 = vand.u32 %v52, 4294901760
    %v382 = vsub.f32 %v52, %v381
    %383 = vmatpush1.msra.mxu0 %v382
    %384 = vmatprep.subr.mxu0 0.0
    %v385 = vand.u32 %v53, 4294901760
    %v386 = vsub.f32 %v53, %v385
    %387 = vmatpush1.msra.mxu0 %v386
    %388 = vmatprep.subr.mxu0 0.0
    %v389 = vand.u32 %v54, 4294901760
    %v390 = vsub.f32 %v54, %v389
    %391 = vmatpush1.msra.mxu0 %v390
    %392 = vmatprep.subr.mxu0 0.0
    %v393 = vand.u32 %v55, 4294901760
    %v394 = vsub.f32 %v55, %v393
    %395 = vmatpush1.msra.mxu0 %v394
    %396 = vmatprep.subr.mxu0 0.0
    %v397 = vand.u32 %v56, 4294901760
    %v398 = vsub.f32 %v56, %v397
    %399 = vmatpush1.msra.mxu0 %v398
    %400 = vmatprep.subr.mxu0 0.0
    %v401 = vand.u32 %v57, 4294901760
    %v402 = vsub.f32 %v57, %v401
    %403 = vmatpush1.msra.mxu0 %v402
    %404 = vmatprep.subr.mxu0 0.0
    %v405 = vand.u32 %v58, 4294901760
    %v406 = vsub.f32 %v58, %v405
    %407 = vmatpush1.msra.mxu0 %v406
    %408 = vmatprep.subr.mxu0 0.0
    %v409 = vand.u32 %v59, 4294901760
    %v410 = vsub.f32 %v59, %v409
    %411 = vmatpush1.msra.mxu0 %v410
    %412 = vmatprep.subr.mxu0 0.0
    %v413 = vand.u32 %v60, 4294901760
    %v414 = vsub.f32 %v60, %v413
    %415 = vmatpush1.msra.mxu0 %v414
    %416 = vmatprep.subr.mxu0 0.0
    %v417 = vand.u32 %v61, 4294901760
    %v418 = vsub.f32 %v61, %v417
    %419 = vmatpush1.msra.mxu0 %v418
    %420 = vmatprep.subr.mxu0 0.0
    %v421 = vand.u32 %v62, 4294901760
    %v422 = vsub.f32 %v62, %v421
    %423 = vmatpush1.msra.mxu0 %v422
    %424 = vmatprep.subr.mxu0 0.0
    %425 = vmatpush1.msra.mxu0 0.0
    %426 = vmatprep.subr.mxu0 0.0
    %427 = vmatpush1.msra.mxu0 0.0
    %428 = vmatprep.subr.mxu0 0.0
    %429 = vmatpush1.msra.mxu0 0.0
    %430 = vmatprep.subr.mxu0 0.0
    %431 = vmatpush1.msra.mxu0 0.0
    %432 = vmatprep.subr.mxu0 0.0
    %433 = vmatpush1.msra.mxu0 0.0
    %434 = vmatprep.subr.mxu0 0.0
    %435 = vmatpush1.msra.mxu0 0.0
    %436 = vmatprep.subr.mxu0 0.0
    %437 = vmatpush1.msra.mxu0 0.0
    %438 = vmatprep.subr.mxu0 0.0
    %439 = vmatpush1.msra.mxu0 0.0
    %440 = vmatprep.subr.mxu0 0.0
    %441 = vmatpush1.msra.mxu0 0.0
    %442 = vmatprep.subr.mxu0 0.0
    %443 = vmatpush1.msra.mxu0 0.0
    %444 = vmatprep.subr.mxu0 0.0
    %445 = vmatpush1.msra.mxu0 0.0
    %446 = vmatprep.subr.mxu0 0.0
    %447 = vmatpush1.msra.mxu0 0.0
    %448 = vmatprep.subr.mxu0 0.0
    %449 = vmatpush1.msra.mxu0 0.0
    %450 = vmatprep.subr.mxu0 0.0
    %451 = vmatpush1.msra.mxu0 0.0
    %452 = vmatprep.subr.mxu0 0.0
    %453 = vmatpush1.msra.mxu0 0.0
    %454 = vmatprep.subr.mxu0 0.0
    %455 = vmatpush1.msra.mxu0 0.0
    %456 = vmatprep.mubr.f32.mxu0 0.0
    %v457 = vand.u32 %v43, 4294901760
    %v458 = vsub.f32 %v43, %v457
    %459 = vmatmul.mubr.f32.gmra.mrb[0].mxu0 %v458
    %v460 = vpop.f32.mrb[0].mxu0
    %v461 = vadd.f32 %v339, %v460
    %v462 = vpop.f32.mrb[0].mxu0
    %463 = vmatprep.mubr.f32.mxu0 0.0
    %v464 = vand.u32 %v44, 4294901760
    %v465 = vsub.f32 %v44, %v464
    %466 = vmatmul.mubr.f32.gmra.mrb[0].mxu0 %v465
    %v467 = vpop.f32.mrb[0].mxu0
    %v468 = vadd.f32 %v345, %v467
    %v469 = vpop.f32.mrb[0].mxu0
    %470 = vmatprep.mubr.f32.mxu0 0.0
    %v471 = vand.u32 %v45, 4294901760
    %v472 = vsub.f32 %v45, %v471
    %473 = vmatmul.mubr.f32.gmra.mrb[0].mxu0 %v472
    %v474 = vpop.f32.mrb[0].mxu0
    %v475 = vadd.f32 %v351, %v474
    %v476 = vpop.f32.mrb[0].mxu0
    %477 = vmatprep.mubr.f32.mxu0 0.0
    %v478 = vand.u32 %v46, 4294901760
    %v479 = vsub.f32 %v46, %v478
    %480 = vmatmul.mubr.f32.gmra.mrb[0].mxu0 %v479
    %v481 = vpop.f32.mrb[0].mxu0
    %v482 = vadd.f32 %v357, %v481
    %v483 = vpop.f32.mrb[0].mxu0
    %484 = vdwg.mxu0
    %485 = vmatprep.subr.mxu0 0.0
    %v486 = vand.u32 %v47, 4294901760
    %487 = vmatpush1.msra.mxu0 %v486
    %488 = vmatprep.subr.mxu0 0.0
    %v489 = vand.u32 %v48, 4294901760
    %490 = vmatpush1.msra.mxu0 %v489
    %491 = vmatprep.subr.mxu0 0.0
    %v492 = vand.u32 %v49, 4294901760
    %493 = vmatpush1.msra.mxu0 %v492
    %494 = vmatprep.subr.mxu0 0.0
    %v495 = vand.u32 %v50, 4294901760
    %496 = vmatpush1.msra.mxu0 %v495
    %497 = vmatprep.subr.mxu0 0.0
    %v498 = vand.u32 %v51, 4294901760
    %499 = vmatpush1.msra.mxu0 %v498
    %500 = vmatprep.subr.mxu0 0.0
    %v501 = vand.u32 %v52, 4294901760
    %502 = vmatpush1.msra.mxu0 %v501
    %503 = vmatprep.subr.mxu0 0.0
    %v504 = vand.u32 %v53, 4294901760
    %505 = vmatpush1.msra.mxu0 %v504
    %506 = vmatprep.subr.mxu0 0.0
    %v507 = vand.u32 %v54, 4294901760
    %508 = vmatpush1.msra.mxu0 %v507
    %509 = vmatprep.subr.mxu0 0.0
    %v510 = vand.u32 %v55, 4294901760
    %511 = vmatpush1.msra.mxu0 %v510
    %512 = vmatprep.subr.mxu0 0.0
    %v513 = vand.u32 %v56, 4294901760
    %514 = vmatpush1.msra.mxu0 %v513
    %515 = vmatprep.subr.mxu0 0.0
    %v516 = vand.u32 %v57, 4294901760
    %517 = vmatpush1.msra.mxu0 %v516
    %518 = vmatprep.subr.mxu0 0.0
    %v519 = vand.u32 %v58, 4294901760
    %520 = vmatpush1.msra.mxu0 %v519
    %521 = vmatprep.subr.mxu0 0.0
    %v522 = vand.u32 %v59, 4294901760
    %523 = vmatpush1.msra.mxu0 %v522
    %524 = vmatprep.subr.mxu0 0.0
    %v525 = vand.u32 %v60, 4294901760
    %526 = vmatpush1.msra.mxu0 %v525
    %527 = vmatprep.subr.mxu0 0.0
    %v528 = vand.u32 %v61, 4294901760
    %529 = vmatpush1.msra.mxu0 %v528
    %530 = vmatprep.subr.mxu0 0.0
    %v531 = vand.u32 %v62, 4294901760
    %532 = vmatpush1.msra.mxu0 %v531
    %533 = vmatprep.subr.mxu0 0.0
    %534 = vmatpush1.msra.mxu0 0.0
    %535 = vmatprep.subr.mxu0 0.0
    %536 = vmatpush1.msra.mxu0 0.0
    %537 = vmatprep.subr.mxu0 0.0
    %538 = vmatpush1.msra.mxu0 0.0
    %539 = vmatprep.subr.mxu0 0.0
    %540 = vmatpush1.msra.mxu0 0.0
    %541 = vmatprep.subr.mxu0 0.0
    %542 = vmatpush1.msra.mxu0 0.0
    %543 = vmatprep.subr.mxu0 0.0
    %544 = vmatpush1.msra.mxu0 0.0
    %545 = vmatprep.subr.mxu0 0.0
    %546 = vmatpush1.msra.mxu0 0.0
    %547 = vmatprep.subr.mxu0 0.0
    %548 = vmatpush1.msra.mxu0 0.0
    %549 = vmatprep.subr.mxu0 0.0
    %550 = vmatpush1.msra.mxu0 0.0
    %551 = vmatprep.subr.mxu0 0.0
    %552 = vmatpush1.msra.mxu0 0.0
    %553 = vmatprep.subr.mxu0 0.0
    %554 = vmatpush1.msra.mxu0 0.0
    %555 = vmatprep.subr.mxu0 0.0
    %556 = vmatpush1.msra.mxu0 0.0
    %557 = vmatprep.subr.mxu0 0.0
    %558 = vmatpush1.msra.mxu0 0.0
    %559 = vmatprep.subr.mxu0 0.0
    %560 = vmatpush1.msra.mxu0 0.0
    %561 = vmatprep.subr.mxu0 0.0
    %562 = vmatpush1.msra.mxu0 0.0
    %563 = vmatprep.subr.mxu0 0.0
    %564 = vmatpush1.msra.mxu0 0.0
    %565 = vmatprep.mubr.f32.mxu0 0.0
    %v566 = vand.u32 %v43, 4294901760
    %v567 = vsub.f32 %v43, %v566
    %v568 = vand.u32 %v567, 4294901760
    %569 = vmatmul.mubr.f32.gmra.mrb[0].mxu0 %v568
    %v570 = vpop.f32.mrb[0].mxu0
    %v571 = vadd.f32 %v461, %v570
    %v572 = vpop.f32.mrb[0].mxu0
    %573 = vmatprep.mubr.f32.mxu0 0.0
    %v574 = vand.u32 %v44, 4294901760
    %v575 = vsub.f32 %v44, %v574
    %v576 = vand.u32 %v575, 4294901760
    %577 = vmatmul.mubr.f32.gmra.mrb[0].mxu0 %v576
    %v578 = vpop.f32.mrb[0].mxu0
    %v579 = vadd.f32 %v468, %v578
    %v580 = vpop.f32.mrb[0].mxu0
    %581 = vmatprep.mubr.f32.mxu0 0.0
    %v582 = vand.u32 %v45, 4294901760
    %v583 = vsub.f32 %v45, %v582
    %v584 = vand.u32 %v583, 4294901760
    %585 = vmatmul.mubr.f32.gmra.mrb[0].mxu0 %v584
    %v586 = vpop.f32.mrb[0].mxu0
    %v587 = vadd.f32 %v475, %v586
    %v588 = vpop.f32.mrb[0].mxu0
    %589 = vmatprep.mubr.f32.mxu0 0.0
    %v590 = vand.u32 %v46, 4294901760
    %v591 = vsub.f32 %v46, %v590
    %v592 = vand.u32 %v591, 4294901760
    %593 = vmatmul.mubr.f32.gmra.mrb[0].mxu0 %v592
    %v594 = vpop.f32.mrb[0].mxu0
    %v595 = vadd.f32 %v482, %v594
    %v596 = vpop.f32.mrb[0].mxu0
    %597 = vdwg.mxu0
    %598 = vmatprep.subr.mxu0 0.0
    %v599 = vand.u32 %v47, 4294901760
    %v600 = vsub.f32 %v47, %v599
    %v601 = vand.u32 %v600, 4294901760
    %602 = vmatpush1.msra.mxu0 %v601
    %603 = vmatprep.subr.mxu0 0.0
    %v604 = vand.u32 %v48, 4294901760
    %v605 = vsub.f32 %v48, %v604
    %v606 = vand.u32 %v605, 4294901760
    %607 = vmatpush1.msra.mxu0 %v606
    %608 = vmatprep.subr.mxu0 0.0
    %v609 = vand.u32 %v49, 4294901760
    %v610 = vsub.f32 %v49, %v609
    %v611 = vand.u32 %v610, 4294901760
    %612 = vmatpush1.msra.mxu0 %v611
    %613 = vmatprep.subr.mxu0 0.0
    %v614 = vand.u32 %v50, 4294901760
    %v615 = vsub.f32 %v50, %v614
    %v616 = vand.u32 %v615, 4294901760
    %617 = vmatpush1.msra.mxu0 %v616
    %618 = vmatprep.subr.mxu0 0.0
    %v619 = vand.u32 %v51, 4294901760
    %v620 = vsub.f32 %v51, %v619
    %v621 = vand.u32 %v620, 4294901760
    %622 = vmatpush1.msra.mxu0 %v621
    %623 = vmatprep.subr.mxu0 0.0
    %v624 = vand.u32 %v52, 4294901760
    %v625 = vsub.f32 %v52, %v624
    %v626 = vand.u32 %v625, 4294901760
    %627 = vmatpush1.msra.mxu0 %v626
    %628 = vmatprep.subr.mxu0 0.0
    %v629 = vand.u32 %v53, 4294901760
    %v630 = vsub.f32 %v53, %v629
    %v631 = vand.u32 %v630, 4294901760
    %632 = vmatpush1.msra.mxu0 %v631
    %633 = vmatprep.subr.mxu0 0.0
    %v634 = vand.u32 %v54, 4294901760
    %v635 = vsub.f32 %v54, %v634
    %v636 = vand.u32 %v635, 4294901760
    %637 = vmatpush1.msra.mxu0 %v636
    %638 = vmatprep.subr.mxu0 0.0
    %v639 = vand.u32 %v55, 4294901760
    %v640 = vsub.f32 %v55, %v639
    %v641 = vand.u32 %v640, 4294901760
    %642 = vmatpush1.msra.mxu0 %v641
    %643 = vmatprep.subr.mxu0 0.0
    %v644 = vand.u32 %v56, 4294901760
    %v645 = vsub.f32 %v56, %v644
    %v646 = vand.u32 %v645, 4294901760
    %647 = vmatpush1.msra.mxu0 %v646
    %648 = vmatprep.subr.mxu0 0.0
    %v649 = vand.u32 %v57, 4294901760
    %v650 = vsub.f32 %v57, %v649
    %v651 = vand.u32 %v650, 4294901760
    %652 = vmatpush1.msra.mxu0 %v651
    %653 = vmatprep.subr.mxu0 0.0
    %v654 = vand.u32 %v58, 4294901760
    %v655 = vsub.f32 %v58, %v654
    %v656 = vand.u32 %v655, 4294901760
    %657 = vmatpush1.msra.mxu0 %v656
    %658 = vmatprep.subr.mxu0 0.0
    %v659 = vand.u32 %v59, 4294901760
    %v660 = vsub.f32 %v59, %v659
    %v661 = vand.u32 %v660, 4294901760
    %662 = vmatpush1.msra.mxu0 %v661
    %663 = vmatprep.subr.mxu0 0.0
    %v664 = vand.u32 %v60, 4294901760
    %v665 = vsub.f32 %v60, %v664
    %v666 = vand.u32 %v665, 4294901760
    %667 = vmatpush1.msra.mxu0 %v666
    %668 = vmatprep.subr.mxu0 0.0
    %v669 = vand.u32 %v61, 4294901760
    %v670 = vsub.f32 %v61, %v669
    %v671 = vand.u32 %v670, 4294901760
    %672 = vmatpush1.msra.mxu0 %v671
    %673 = vmatprep.subr.mxu0 0.0
    %v674 = vand.u32 %v62, 4294901760
    %v675 = vsub.f32 %v62, %v674
    %v676 = vand.u32 %v675, 4294901760
    %677 = vmatpush1.msra.mxu0 %v676
    %678 = vmatprep.subr.mxu0 0.0
    %679 = vmatpush1.msra.mxu0 0.0
    %680 = vmatprep.subr.mxu0 0.0
    %681 = vmatpush1.msra.mxu0 0.0
    %682 = vmatprep.subr.mxu0 0.0
    %683 = vmatpush1.msra.mxu0 0.0
    %684 = vmatprep.subr.mxu0 0.0
    %685 = vmatpush1.msra.mxu0 0.0
    %686 = vmatprep.subr.mxu0 0.0
    %687 = vmatpush1.msra.mxu0 0.0
    %688 = vmatprep.subr.mxu0 0.0
    %689 = vmatpush1.msra.mxu0 0.0
    %690 = vmatprep.subr.mxu0 0.0
    %691 = vmatpush1.msra.mxu0 0.0
    %692 = vmatprep.subr.mxu0 0.0
    %693 = vmatpush1.msra.mxu0 0.0
    %694 = vmatprep.subr.mxu0 0.0
    %695 = vmatpush1.msra.mxu0 0.0
    %696 = vmatprep.subr.mxu0 0.0
    %697 = vmatpush1.msra.mxu0 0.0
    %698 = vmatprep.subr.mxu0 0.0
    %699 = vmatpush1.msra.mxu0 0.0
    %700 = vmatprep.subr.mxu0 0.0
    %701 = vmatpush1.msra.mxu0 0.0
    %702 = vmatprep.subr.mxu0 0.0
    %703 = vmatpush1.msra.mxu0 0.0
    %704 = vmatprep.subr.mxu0 0.0
    %705 = vmatpush1.msra.mxu0 0.0
    %706 = vmatprep.subr.mxu0 0.0
    %707 = vmatpush1.msra.mxu0 0.0
    %708 = vmatprep.subr.mxu0 0.0
    %709 = vmatpush1.msra.mxu0 0.0
    %710 = vmatprep.mubr.f32.mxu0 0.0
    %v711 = vand.u32 %v43, 4294901760
    %712 = vmatmul.mubr.f32.gmra.mrb[0].mxu0 %v711
    %v713 = vpop.f32.mrb[0].mxu0
    %v714 = vadd.f32 %v571, %v713
    %v715 = vpop.f32.mrb[0].mxu0
    %716 = vmatprep.mubr.f32.mxu0 0.0
    %v717 = vand.u32 %v44, 4294901760
    %718 = vmatmul.mubr.f32.gmra.mrb[0].mxu0 %v717
    %v719 = vpop.f32.mrb[0].mxu0
    %v720 = vadd.f32 %v579, %v719
    %v721 = vpop.f32.mrb[0].mxu0
    %722 = vmatprep.mubr.f32.mxu0 0.0
    %v723 = vand.u32 %v45, 4294901760
    %724 = vmatmul.mubr.f32.gmra.mrb[0].mxu0 %v723
    %v725 = vpop.f32.mrb[0].mxu0
    %v726 = vadd.f32 %v587, %v725
    %v727 = vpop.f32.mrb[0].mxu0
    %728 = vmatprep.mubr.f32.mxu0 0.0
    %v729 = vand.u32 %v46, 4294901760
    %730 = vmatmul.mubr.f32.gmra.mrb[0].mxu0 %v729
    %v731 = vpop.f32.mrb[0].mxu0
    %v732 = vadd.f32 %v595, %v731
    %v733 = vpop.f32.mrb[0].mxu0
    %734 = vdwg.mxu0
    %735 = vmatprep.subr.mxu0 0.0
    %v736 = vand.u32 %v47, 4294901760
    %737 = vmatpush1.msra.mxu0 %v736
    %738 = vmatprep.subr.mxu0 0.0
    %v739 = vand.u32 %v48, 4294901760
    %740 = vmatpush1.msra.mxu0 %v739
    %741 = vmatprep.subr.mxu0 0.0
    %v742 = vand.u32 %v49, 4294901760
    %743 = vmatpush1.msra.mxu0 %v742
    %744 = vmatprep.subr.mxu0 0.0
    %v745 = vand.u32 %v50, 4294901760
    %746 = vmatpush1.msra.mxu0 %v745
    %747 = vmatprep.subr.mxu0 0.0
    %v748 = vand.u32 %v51, 4294901760
    %749 = vmatpush1.msra.mxu0 %v748
    %750 = vmatprep.subr.mxu0 0.0
    %v751 = vand.u32 %v52, 4294901760
    %752 = vmatpush1.msra.mxu0 %v751
    %753 = vmatprep.subr.mxu0 0.0
    %v754 = vand.u32 %v53, 4294901760
    %755 = vmatpush1.msra.mxu0 %v754
    %756 = vmatprep.subr.mxu0 0.0
    %v757 = vand.u32 %v54, 4294901760
    %758 = vmatpush1.msra.mxu0 %v757
    %759 = vmatprep.subr.mxu0 0.0
    %v760 = vand.u32 %v55, 4294901760
    %761 = vmatpush1.msra.mxu0 %v760
    %762 = vmatprep.subr.mxu0 0.0
    %v763 = vand.u32 %v56, 4294901760
    %764 = vmatpush1.msra.mxu0 %v763
    %765 = vmatprep.subr.mxu0 0.0
    %v766 = vand.u32 %v57, 4294901760
    %767 = vmatpush1.msra.mxu0 %v766
    %768 = vmatprep.subr.mxu0 0.0
    %v769 = vand.u32 %v58, 4294901760
    %770 = vmatpush1.msra.mxu0 %v769
    %771 = vmatprep.subr.mxu0 0.0
    %v772 = vand.u32 %v59, 4294901760
    %773 = vmatpush1.msra.mxu0 %v772
    %774 = vmatprep.subr.mxu0 0.0
    %v775 = vand.u32 %v60, 4294901760
    %776 = vmatpush1.msra.mxu0 %v775
    %777 = vmatprep.subr.mxu0 0.0
    %v778 = vand.u32 %v61, 4294901760
    %779 = vmatpush1.msra.mxu0 %v778
    %780 = vmatprep.subr.mxu0 0.0
    %v781 = vand.u32 %v62, 4294901760
    %782 = vmatpush1.msra.mxu0 %v781
    %783 = vmatprep.subr.mxu0 0.0
    %784 = vmatpush1.msra.mxu0 0.0
    %785 = vmatprep.subr.mxu0 0.0
    %786 = vmatpush1.msra.mxu0 0.0
    %787 = vmatprep.subr.mxu0 0.0
    %788 = vmatpush1.msra.mxu0 0.0
    %789 = vmatprep.subr.mxu0 0.0
    %790 = vmatpush1.msra.mxu0 0.0
    %791 = vmatprep.subr.mxu0 0.0
    %792 = vmatpush1.msra.mxu0 0.0
    %793 = vmatprep.subr.mxu0 0.0
    %794 = vmatpush1.msra.mxu0 0.0
    %795 = vmatprep.subr.mxu0 0.0
    %796 = vmatpush1.msra.mxu0 0.0
    %797 = vmatprep.subr.mxu0 0.0
    %798 = vmatpush1.msra.mxu0 0.0
    %799 = vmatprep.subr.mxu0 0.0
    %800 = vmatpush1.msra.mxu0 0.0
    %801 = vmatprep.subr.mxu0 0.0
    %802 = vmatpush1.msra.mxu0 0.0
    %803 = vmatprep.subr.mxu0 0.0
    %804 = vmatpush1.msra.mxu0 0.0
    %805 = vmatprep.subr.mxu0 0.0
    %806 = vmatpush1.msra.mxu0 0.0
    %807 = vmatprep.subr.mxu0 0.0
    %808 = vmatpush1.msra.mxu0 0.0
    %809 = vmatprep.subr.mxu0 0.0
    %810 = vmatpush1.msra.mxu0 0.0
    %811 = vmatprep.subr.mxu0 0.0
    %812 = vmatpush1.msra.mxu0 0.0
    %813 = vmatprep.subr.mxu0 0.0
    %814 = vmatpush1.msra.mxu0 0.0
    %815 = vmatprep.mubr.f32.mxu0 0.0
    %v816 = vand.u32 %v43, 4294901760
    %817 = vmatmul.mubr.f32.gmra.mrb[0].mxu0 %v816
    %v818 = vpop.f32.mrb[0].mxu0
    %v819 = vadd.f32 %v714, %v818
    %v820 = vpop.f32.mrb[0].mxu0
    %821 = vmatprep.mubr.f32.mxu0 0.0
    %v822 = vand.u32 %v44, 4294901760
    %823 = vmatmul.mubr.f32.gmra.mrb[0].mxu0 %v822
    %v824 = vpop.f32.mrb[0].mxu0
    %v825 = vadd.f32 %v720, %v824
    %v826 = vpop.f32.mrb[0].mxu0
    %827 = vmatprep.mubr.f32.mxu0 0.0
    %v828 = vand.u32 %v45, 4294901760
    %829 = vmatmul.mubr.f32.gmra.mrb[0].mxu0 %v828
    %v830 = vpop.f32.mrb[0].mxu0
    %v831 = vadd.f32 %v726, %v830
    %v832 = vpop.f32.mrb[0].mxu0
    %833 = vmatprep.mubr.f32.mxu0 0.0
    %v834 = vand.u32 %v46, 4294901760
    %835 = vmatmul.mubr.f32.gmra.mrb[0].mxu0 %v834
    %v836 = vpop.f32.mrb[0].mxu0
    %v837 = vadd.f32 %v732, %v836
    %v838 = vpop.f32.mrb[0].mxu0
    %839 = vdwg.mxu0
    %v840 = vand.u32 2147483647, %v819
    %vm841 = vcmp.le.f32.partialorder %v840, 0.7853982
    %vm842 = vcmp.lt.s32.totalorder %v819, 0
    %v843 = vand.u32 %v819, 2139095040
    %v844 = vshrl.u32 %v843, 23
    %v845 = vsub.s32 %v844, 127
    %v846 = vand.u32 2147483647, %v819
    %v847 = vand.u32 %v846, 8388607
    %v848 = vor.u32 %v847, 8388608
    %v849 = vsub.s32 0, %v848
    %v850 = vadd.s32 %v845, 1
    %vm851 = vcmp.gt.s32.totalorder %v850, 0
    %v852 = vsel %vm851, %v850, 0
    %v853 = vshrl.u32 %v852, 5
    %v854 = vand.u32 %v852, 31
    %v855 = vsub.s32 32, %v854
    %v856 = vshrl.u32 683565275, %v855
    %v857 = vshll.u32 683565275, %v854
    %v858 = vshrl.u32 2475754826, %v855
    %v859 = vor.u32 %v857, %v858
    %v860 = vshll.u32 2475754826, %v854
    %v861 = vshrl.u32 2131351028, %v855
    %v862 = vor.u32 %v860, %v861
    %v863 = vshll.u32 2131351028, %v854
    %v864 = vshrl.u32 2102212464, %v855
    %v865 = vor.u32 %v863, %v864
    %v866 = vshll.u32 2102212464, %v854
    %v867 = vshrl.u32 920167782, %v855
    %v868 = vor.u32 %v866, %v867
    %v869 = vshll.u32 920167782, %v854
    %v870 = vshrl.u32 1326507024, %v855
    %v871 = vor.u32 %v869, %v870
    %vm872 = vcmp.lt.s32.totalorder %v853, 1
    %vm873 = vcmp.lt.s32.totalorder %v853, 2
    %vm874 = vcmp.lt.s32.totalorder %v853, 3
    %vm875 = vcmp.lt.s32.totalorder %v853, 4
    %v876 = vsel %vm872, %v856, %v859
    %v877 = vsel %vm875, %v865, 2102212464
    %v878 = vsel %vm874, %v862, %v877
    %v879 = vsel %vm873, %v876, %v878
    %v880 = vsel %vm872, %v859, %v862
    %v881 = vsel %vm875, %v868, 920167782
    %v882 = vsel %vm874, %v865, %v881
    %v883 = vsel %vm873, %v880, %v882
    %v884 = vsel %vm872, %v862, %v865
    %v885 = vsel %vm875, %v871, 1326507024
    %v886 = vsel %vm874, %v868, %v885
    %v887 = vsel %vm873, %v884, %v886
    %v888 = vshll.u32 %v848, 8
    %v889 = vmul.u32.u64.compose %v888, %v887
    %v890 = vextract.low.u32 %v889
    %v891 = vextract.high.u32 %v889
    %v892 = vmul.u32.u64.compose %v888, %v883
    %v893 = vextract.low.u32 %v892
    %v894 = vextract.high.u32 %v892
    %v895 = vmul.u32 %v888, %v879
    %v896 = vadd.s32 %v891, %v893
    %vm897 = vc.u32 %v891, %v893
    %v898 = vadd.s32 %v894, 1
    %v899 = vsel %vm897, %v898, %v894
    %v900 = vadd.s32 %v895, %v899
    %v901 = vadd.s32 %v900, 536870912
    %v902 = vshrl.u32 %v901, 30
    %v903 = vshll.u32 %v902, 30
    %v904 = vsub.s32 %v900, %v903
    %vm905 = vcmp.lt.s32.totalorder %v904, 0
    %v906 = vsub.s32 0, %v904
    %v907 = vsel %vm905, %v906, %v904
    %v908 = vclz %v907
    %v909 = vsub.s32 %v908, 2
    %vm910 = vcmp.gt.s32.totalorder 0, %v909
    %v911 = vsel %vm910, 0, %v909
    %v912 = vsub.s32 32, %v911
    %v913 = vshll.u32 %v904, %v911
    %v914 = vshrl.u32 %v896, %v912
    %v915 = vor.u32 %v913, %v914
    %v916 = vsub.s32 4294967266, %v911
    %v917 = vadd.s32 %v916, 127
    %v918 = vshll.u32 %v917, 23
    %v919 = vor.u32 4788187, %v918
    %v920 = vand.u32 2147483647, %v919
    %v922 = vcvt.s32.f32 %v915
    %v923 = vmul.f32 %v922, %v920
    %v924 = vxor.u32 %v923, 2147483648
    %v925 = vsel %vm842, %v924, %v923
    %v926 = vsub.s32 4, %v902
    %v927 = vsel %vm842, %v926, %v902
    %v928 = vsel %vm841, %v819, %v925
    %v929 = vsel %vm841, 0, %v927
    %v930 = vcosq.f32.pop %v928
    %v931 = vsinq.f32.pop %v928
    %vm932 = vweird.f32 %v819
    %v933 = vadd.s32 %v929, 3
    %v934 = vand.u32 %v933, 3
    %vm935 = vcmp.lt.s32.totalorder %v934, 2
    %vm936 = vcmp.eq.s32.totalorder %v934, 0
    %v937 = vxor.u32 %v931, 2147483648
    %v938 = vsel %vm936, %v930, %v937
    %vm939 = vcmp.eq.s32.totalorder %v934, 2
    %v940 = vxor.u32 %v930, 2147483648
    %v941 = vsel %vm939, %v940, %v931
    %v942 = vsel %vm935, %v938, %v941
    %v943 = vsel %vm932, nan, %v942
    %v944 = vand.u32 2147483647, %v825
    %vm945 = vcmp.le.f32.partialorder %v944, 0.7853982
    %vm946 = vcmp.lt.s32.totalorder %v825, 0
    %v947 = vand.u32 %v825, 2139095040
    %v948 = vshrl.u32 %v947, 23
    %v949 = vsub.s32 %v948, 127
    %v950 = vand.u32 2147483647, %v825
    %v951 = vand.u32 %v950, 8388607
    %v952 = vor.u32 %v951, 8388608
    %v953 = vsub.s32 0, %v952
    %v954 = vadd.s32 %v949, 1
    %vm955 = vcmp.gt.s32.totalorder %v954, 0
    %v956 = vsel %vm955, %v954, 0
    %v957 = vshrl.u32 %v956, 5
    %v958 = vand.u32 %v956, 31
    %v959 = vsub.s32 32, %v958
    %v960 = vshrl.u32 683565275, %v959
    %v961 = vshll.u32 683565275, %v958
    %v962 = vshrl.u32 2475754826, %v959
    %v963 = vor.u32 %v961, %v962
    %v964 = vshll.u32 2475754826, %v958
    %v965 = vshrl.u32 2131351028, %v959
    %v966 = vor.u32 %v964, %v965
    %v967 = vshll.u32 2131351028, %v958
    %v968 = vshrl.u32 2102212464, %v959
    %v969 = vor.u32 %v967, %v968
    %v970 = vshll.u32 2102212464, %v958
    %v971 = vshrl.u32 920167782, %v959
    %v972 = vor.u32 %v970, %v971
    %v973 = vshll.u32 920167782, %v958
    %v974 = vshrl.u32 1326507024, %v959
    %v975 = vor.u32 %v973, %v974
    %vm976 = vcmp.lt.s32.totalorder %v957, 1
    %vm977 = vcmp.lt.s32.totalorder %v957, 2
    %vm978 = vcmp.lt.s32.totalorder %v957, 3
    %vm979 = vcmp.lt.s32.totalorder %v957, 4
    %v980 = vsel %vm976, %v960, %v963
    %v981 = vsel %vm979, %v969, 2102212464
    %v982 = vsel %vm978, %v966, %v981
    %v983 = vsel %vm977, %v980, %v982
    %v984 = vsel %vm976, %v963, %v966
    %v985 = vsel %vm979, %v972, 920167782
    %v986 = vsel %vm978, %v969, %v985
    %v987 = vsel %vm977, %v984, %v986
    %v988 = vsel %vm976, %v966, %v969
    %v989 = vsel %vm979, %v975, 1326507024
    %v990 = vsel %vm978, %v972, %v989
    %v991 = vsel %vm977, %v988, %v990
    %v992 = vshll.u32 %v952, 8
    %v993 = vmul.u32.u64.compose %v992, %v991
    %v994 = vextract.low.u32 %v993
    %v995 = vextract.high.u32 %v993
    %v996 = vmul.u32.u64.compose %v992, %v987
    %v997 = vextract.low.u32 %v996
    %v998 = vextract.high.u32 %v996
    %v999 = vmul.u32 %v992, %v983
    %v1000 = vadd.s32 %v995, %v997
    %vm1001 = vc.u32 %v995, %v997
    %v1002 = vadd.s32 %v998, 1
    %v1003 = vsel %vm1001, %v1002, %v998
    %v1004 = vadd.s32 %v999, %v1003
    %v1005 = vadd.s32 %v1004, 536870912
    %v1006 = vshrl.u32 %v1005, 30
    %v1007 = vshll.u32 %v1006, 30
    %v1008 = vsub.s32 %v1004, %v1007
    %vm1009 = vcmp.lt.s32.totalorder %v1008, 0
    %v1010 = vsub.s32 0, %v1008
    %v1011 = vsel %vm1009, %v1010, %v1008
    %v1012 = vclz %v1011
    %v1013 = vsub.s32 %v1012, 2
    %vm1014 = vcmp.gt.s32.totalorder 0, %v1013
    %v1015 = vsel %vm1014, 0, %v1013
    %v1016 = vsub.s32 32, %v1015
    %v1017 = vshll.u32 %v1008, %v1015
    %v1018 = vshrl.u32 %v1000, %v1016
    %v1019 = vor.u32 %v1017, %v1018
    %v1020 = vsub.s32 4294967266, %v1015
    %v1021 = vadd.s32 %v1020, 127
    %v1022 = vshll.u32 %v1021, 23
    %v1023 = vor.u32 4788187, %v1022
    %v1024 = vand.u32 2147483647, %v1023
    %v1026 = vcvt.s32.f32 %v1019
    %v1027 = vmul.f32 %v1026, %v1024
    %v1028 = vxor.u32 %v1027, 2147483648
    %v1029 = vsel %vm946, %v1028, %v1027
    %v1030 = vsub.s32 4, %v1006
    %v1031 = vsel %vm946, %v1030, %v1006
    %v1032 = vsel %vm945, %v825, %v1029
    %v1033 = vsel %vm945, 0, %v1031
    %v1034 = vcosq.f32.pop %v1032
    %v1035 = vsinq.f32.pop %v1032
    %vm1036 = vweird.f32 %v825
    %v1037 = vadd.s32 %v1033, 3
    %v1038 = vand.u32 %v1037, 3
    %vm1039 = vcmp.lt.s32.totalorder %v1038, 2
    %vm1040 = vcmp.eq.s32.totalorder %v1038, 0
    %v1041 = vxor.u32 %v1035, 2147483648
    %v1042 = vsel %vm1040, %v1034, %v1041
    %vm1043 = vcmp.eq.s32.totalorder %v1038, 2
    %v1044 = vxor.u32 %v1034, 2147483648
    %v1045 = vsel %vm1043, %v1044, %v1035
    %v1046 = vsel %vm1039, %v1042, %v1045
    %v1047 = vsel %vm1036, nan, %v1046
    %v1048 = vand.u32 2147483647, %v831
    %vm1049 = vcmp.le.f32.partialorder %v1048, 0.7853982
    %vm1050 = vcmp.lt.s32.totalorder %v831, 0
    %v1051 = vand.u32 %v831, 2139095040
    %v1052 = vshrl.u32 %v1051, 23
    %v1053 = vsub.s32 %v1052, 127
    %v1054 = vand.u32 2147483647, %v831
    %v1055 = vand.u32 %v1054, 8388607
    %v1056 = vor.u32 %v1055, 8388608
    %v1057 = vsub.s32 0, %v1056
    %v1058 = vadd.s32 %v1053, 1
    %vm1059 = vcmp.gt.s32.totalorder %v1058, 0
    %v1060 = vsel %vm1059, %v1058, 0
    %v1061 = vshrl.u32 %v1060, 5
    %v1062 = vand.u32 %v1060, 31
    %v1063 = vsub.s32 32, %v1062
    %v1064 = vshrl.u32 683565275, %v1063
    %v1065 = vshll.u32 683565275, %v1062
    %v1066 = vshrl.u32 2475754826, %v1063
    %v1067 = vor.u32 %v1065, %v1066
    %v1068 = vshll.u32 2475754826, %v1062
    %v1069 = vshrl.u32 2131351028, %v1063
    %v1070 = vor.u32 %v1068, %v1069
    %v1071 = vshll.u32 2131351028, %v1062
    %v1072 = vshrl.u32 2102212464, %v1063
    %v1073 = vor.u32 %v1071, %v1072
    %v1074 = vshll.u32 2102212464, %v1062
    %v1075 = vshrl.u32 920167782, %v1063
    %v1076 = vor.u32 %v1074, %v1075
    %v1077 = vshll.u32 920167782, %v1062
    %v1078 = vshrl.u32 1326507024, %v1063
    %v1079 = vor.u32 %v1077, %v1078
    %vm1080 = vcmp.lt.s32.totalorder %v1061, 1
    %vm1081 = vcmp.lt.s32.totalorder %v1061, 2
    %vm1082 = vcmp.lt.s32.totalorder %v1061, 3
    %vm1083 = vcmp.lt.s32.totalorder %v1061, 4
    %v1084 = vsel %vm1080, %v1064, %v1067
    %v1085 = vsel %vm1083, %v1073, 2102212464
    %v1086 = vsel %vm1082, %v1070, %v1085
    %v1087 = vsel %vm1081, %v1084, %v1086
    %v1088 = vsel %vm1080, %v1067, %v1070
    %v1089 = vsel %vm1083, %v1076, 920167782
    %v1090 = vsel %vm1082, %v1073, %v1089
    %v1091 = vsel %vm1081, %v1088, %v1090
    %v1092 = vsel %vm1080, %v1070, %v1073
    %v1093 = vsel %vm1083, %v1079, 1326507024
    %v1094 = vsel %vm1082, %v1076, %v1093
    %v1095 = vsel %vm1081, %v1092, %v1094
    %v1096 = vshll.u32 %v1056, 8
    %v1097 = vmul.u32.u64.compose %v1096, %v1095
    %v1098 = vextract.low.u32 %v1097
    %v1099 = vextract.high.u32 %v1097
    %v1100 = vmul.u32.u64.compose %v1096, %v1091
    %v1101 = vextract.low.u32 %v1100
    %v1102 = vextract.high.u32 %v1100
    %v1103 = vmul.u32 %v1096, %v1087
    %v1104 = vadd.s32 %v1099, %v1101
    %vm1105 = vc.u32 %v1099, %v1101
    %v1106 = vadd.s32 %v1102, 1
    %v1107 = vsel %vm1105, %v1106, %v1102
    %v1108 = vadd.s32 %v1103, %v1107
    %v1109 = vadd.s32 %v1108, 536870912
    %v1110 = vshrl.u32 %v1109, 30
    %v1111 = vshll.u32 %v1110, 30
    %v1112 = vsub.s32 %v1108, %v1111
    %vm1113 = vcmp.lt.s32.totalorder %v1112, 0
    %v1114 = vsub.s32 0, %v1112
    %v1115 = vsel %vm1113, %v1114, %v1112
    %v1116 = vclz %v1115
    %v1117 = vsub.s32 %v1116, 2
    %vm1118 = vcmp.gt.s32.totalorder 0, %v1117
    %v1119 = vsel %vm1118, 0, %v1117
    %v1120 = vsub.s32 32, %v1119
    %v1121 = vshll.u32 %v1112, %v1119
    %v1122 = vshrl.u32 %v1104, %v1120
    %v1123 = vor.u32 %v1121, %v1122
    %v1124 = vsub.s32 4294967266, %v1119
    %v1125 = vadd.s32 %v1124, 127
    %v1126 = vshll.u32 %v1125, 23
    %v1127 = vor.u32 4788187, %v1126
    %v1128 = vand.u32 2147483647, %v1127
    %v1130 = vcvt.s32.f32 %v1123
    %v1131 = vmul.f32 %v1130, %v1128
    %v1132 = vxor.u32 %v1131, 2147483648
    %v1133 = vsel %vm1050, %v1132, %v1131
    %v1134 = vsub.s32 4, %v1110
    %v1135 = vsel %vm1050, %v1134, %v1110
    %v1136 = vsel %vm1049, %v831, %v1133
    %v1137 = vsel %vm1049, 0, %v1135
    %v1138 = vcosq.f32.pop %v1136
    %v1139 = vsinq.f32.pop %v1136
    %vm1140 = vweird.f32 %v831
    %v1141 = vadd.s32 %v1137, 3
    %v1142 = vand.u32 %v1141, 3
    %vm1143 = vcmp.lt.s32.totalorder %v1142, 2
    %vm1144 = vcmp.eq.s32.totalorder %v1142, 0
    %v1145 = vxor.u32 %v1139, 2147483648
    %v1146 = vsel %vm1144, %v1138, %v1145
    %vm1147 = vcmp.eq.s32.totalorder %v1142, 2
    %v1148 = vxor.u32 %v1138, 2147483648
    %v1149 = vsel %vm1147, %v1148, %v1139
    %v1150 = vsel %vm1143, %v1146, %v1149
    %v1151 = vsel %vm1140, nan, %v1150
    %v1152 = vand.u32 2147483647, %v837
    %vm1153 = vcmp.le.f32.partialorder %v1152, 0.7853982
    %vm1154 = vcmp.lt.s32.totalorder %v837, 0
    %v1155 = vand.u32 %v837, 2139095040
    %v1156 = vshrl.u32 %v1155, 23
    %v1157 = vsub.s32 %v1156, 127
    %v1158 = vand.u32 2147483647, %v837
    %v1159 = vand.u32 %v1158, 8388607
    %v1160 = vor.u32 %v1159, 8388608
    %v1161 = vsub.s32 0, %v1160
    %v1162 = vadd.s32 %v1157, 1
    %vm1163 = vcmp.gt.s32.totalorder %v1162, 0
    %v1164 = vsel %vm1163, %v1162, 0
    %v1165 = vshrl.u32 %v1164, 5
    %v1166 = vand.u32 %v1164, 31
    %v1167 = vsub.s32 32, %v1166
    %v1168 = vshrl.u32 683565275, %v1167
    %v1169 = vshll.u32 683565275, %v1166
    %v1170 = vshrl.u32 2475754826, %v1167
    %v1171 = vor.u32 %v1169, %v1170
    %v1172 = vshll.u32 2475754826, %v1166
    %v1173 = vshrl.u32 2131351028, %v1167
    %v1174 = vor.u32 %v1172, %v1173
    %v1175 = vshll.u32 2131351028, %v1166
    %v1176 = vshrl.u32 2102212464, %v1167
    %v1177 = vor.u32 %v1175, %v1176
    %v1178 = vshll.u32 2102212464, %v1166
    %v1179 = vshrl.u32 920167782, %v1167
    %v1180 = vor.u32 %v1178, %v1179
    %v1181 = vshll.u32 920167782, %v1166
    %v1182 = vshrl.u32 1326507024, %v1167
    %v1183 = vor.u32 %v1181, %v1182
    %vm1184 = vcmp.lt.s32.totalorder %v1165, 1
    %vm1185 = vcmp.lt.s32.totalorder %v1165, 2
    %vm1186 = vcmp.lt.s32.totalorder %v1165, 3
    %vm1187 = vcmp.lt.s32.totalorder %v1165, 4
    %v1188 = vsel %vm1184, %v1168, %v1171
    %v1189 = vsel %vm1187, %v1177, 2102212464
    %v1190 = vsel %vm1186, %v1174, %v1189
    %v1191 = vsel %vm1185, %v1188, %v1190
    %v1192 = vsel %vm1184, %v1171, %v1174
    %v1193 = vsel %vm1187, %v1180, 920167782
    %v1194 = vsel %vm1186, %v1177, %v1193
    %v1195 = vsel %vm1185, %v1192, %v1194
    %v1196 = vsel %vm1184, %v1174, %v1177
    %v1197 = vsel %vm1187, %v1183, 1326507024
    %v1198 = vsel %vm1186, %v1180, %v1197
    %v1199 = vsel %vm1185, %v1196, %v1198
    %v1200 = vshll.u32 %v1160, 8
    %v1201 = vmul.u32.u64.compose %v1200, %v1199
    %v1202 = vextract.low.u32 %v1201
    %v1203 = vextract.high.u32 %v1201
    %v1204 = vmul.u32.u64.compose %v1200, %v1195
    %v1205 = vextract.low.u32 %v1204
    %v1206 = vextract.high.u32 %v1204
    %v1207 = vmul.u32 %v1200, %v1191
    %v1208 = vadd.s32 %v1203, %v1205
    %vm1209 = vc.u32 %v1203, %v1205
    %v1210 = vadd.s32 %v1206, 1
    %v1211 = vsel %vm1209, %v1210, %v1206
    %v1212 = vadd.s32 %v1207, %v1211
    %v1213 = vadd.s32 %v1212, 536870912
    %v1214 = vshrl.u32 %v1213, 30
    %v1215 = vshll.u32 %v1214, 30
    %v1216 = vsub.s32 %v1212, %v1215
    %vm1217 = vcmp.lt.s32.totalorder %v1216, 0
    %v1218 = vsub.s32 0, %v1216
    %v1219 = vsel %vm1217, %v1218, %v1216
    %v1220 = vclz %v1219
    %v1221 = vsub.s32 %v1220, 2
    %vm1222 = vcmp.gt.s32.totalorder 0, %v1221
    %v1223 = vsel %vm1222, 0, %v1221
    %v1224 = vsub.s32 32, %v1223
    %v1225 = vshll.u32 %v1216, %v1223
    %v1226 = vshrl.u32 %v1208, %v1224
    %v1227 = vor.u32 %v1225, %v1226
    %v1228 = vsub.s32 4294967266, %v1223
    %v1229 = vadd.s32 %v1228, 127
    %v1230 = vshll.u32 %v1229, 23
    %v1231 = vor.u32 4788187, %v1230
    %v1232 = vand.u32 2147483647, %v1231
    %v1234 = vcvt.s32.f32 %v1227
    %v1235 = vmul.f32 %v1234, %v1232
    %v1236 = vxor.u32 %v1235, 2147483648
    %v1237 = vsel %vm1154, %v1236, %v1235
    %v1238 = vsub.s32 4, %v1214
    %v1239 = vsel %vm1154, %v1238, %v1214
    %v1240 = vsel %vm1153, %v837, %v1237
    %v1241 = vsel %vm1153, 0, %v1239
    %v1242 = vcosq.f32.pop %v1240
    %v1243 = vsinq.f32.pop %v1240
    %vm1244 = vweird.f32 %v837
    %v1245 = vadd.s32 %v1241, 3
    %v1246 = vand.u32 %v1245, 3
    %vm1247 = vcmp.lt.s32.totalorder %v1246, 2
    %vm1248 = vcmp.eq.s32.totalorder %v1246, 0
    %v1249 = vxor.u32 %v1243, 2147483648
    %v1250 = vsel %vm1248, %v1242, %v1249
    %vm1251 = vcmp.eq.s32.totalorder %v1246, 2
    %v1252 = vxor.u32 %v1242, 2147483648
    %v1253 = vsel %vm1251, %v1252, %v1243
    %v1254 = vsel %vm1247, %v1250, %v1253
    %v1255 = vsel %vm1244, nan, %v1254
    %1256 = vst [vmem:[#allocation7] sm:$0xff] %v943
    %1257 = vst [vmem:[#allocation7 + $0x8] sm:$0xff] %v1047
    %1258 = vst [vmem:[#allocation7 + $0x10] sm:$0xff] %v1151
    %1259 = vst [vmem:[#allocation7 + $0x18] sm:$0xff] %v1255
    // Predicated region
    $region22: #{tpu_custom_call.1} parent=1 // pred_check
      _
    $region23: #{tpu_custom_call.1} parent=1 // pred_check_branch
      %1261 = sbr.rel (0) target = $region25
    $region24: #{tpu_custom_call.1} parent=1 // pred_region
      %s1263 = ssub.s32 512, 512
      %1264 = vsyncadd [#allocation4], %s1263
      %s1265 = sshll.u32 [#allocation7], 4
      %s1266 = int_to_ptr.vmem [resolvable:$true] %s1265
      %1271 = dma.vmem_to_hbm [thread:$0]  %s1266, 512, %s3, [#allocation4], 128, 128, 8
    $region25: #{tpu_custom_call.1} parent=1 // pred_fallthru
      _
    // Predicated region
    $region26: #{tpu_custom_call.1} parent=1 // pred_check
      _
    $region27: #{tpu_custom_call.1} parent=1 // pred_check_branch
      %1273 = sbr.rel (0) target = $region29
    $region28: #{tpu_custom_call.1} parent=1 // pred_region
      %1274 = dma.done [#allocation4], 512
    $region29: #{tpu_custom_call.1} parent=1 // pred_fallthru
      _
    %1275 = vsyncpa [#allocation3], 1
    %1276 = vsyncpa [#allocation6], 1
    %1277 = vsyncpa [#allocation4], 1

</llo_original>
